<compile_context>
chip_gen: v7x
topology: tpu7x:2x2x1
jax: 0.10.0
libtpu: 0.0.40
codegen_flags: <defaults>
</compile_context>

<pallas_src>
import jax
import jax.numpy as jnp
from jax.experimental import pallas as pl
from jax.experimental.pallas import tpu as pltpu


def _round_up(v, m):
    return (v + m - 1) // m * m


# -----------------------------------------------------------------------------
# Fused kernel: conv1 + LeakyReLU -> conv2 + LeakyReLU -> Linear
# One grid step = one batch element.
# -----------------------------------------------------------------------------
def _fused_move_kernel(slope):
    def kernel(x_ref, w1_ref, w2_ref, wl_ref, b1_ref, b2_ref, bl_ref,
               o_ref, he_ref, ho_ref):
        L2 = o_ref.shape[1]          # = T // 4 output time steps
        H = b1_ref.shape[1]          # conv1 output channels

        def leaky(v):
            return jnp.where(v >= 0.0, v, slope * v)

        def dot(a, w):
            return jnp.dot(a, w, preferred_element_type=jnp.float32)

        w1 = w1_ref[...]             # (4C, H)  bf16, tap-major flattened
        b1 = b1_ref[...]             # (1, H)   f32

        # conv1 (k=4, s=2, p=1): dense matmuls over pre-grouped 4-tap windows.
        #   x_ref[0,0][m] = window for h1[2m]   (even conv1 outputs)
        #   x_ref[0,1][m] = window for h1[2m+1] (odd  conv1 outputs)
        h1e = leaky(dot(x_ref[0, 0], w1) + b1)          # (L2, H) f32
        h1o = leaky(dot(x_ref[0, 1], w1) + b1)          # (L2, H) f32

        # Stage into zero-padded scratch: conv2's halo rows must be exact
        # zeros (conv2 pads AFTER the activation, and leaky(b1) != 0).
        zrow = jnp.zeros((1, H), jnp.float32)
        he_ref[pl.ds(0, L2), :] = h1e
        he_ref[pl.ds(L2, 1), :] = zrow
        ho_ref[pl.ds(0, 1), :] = zrow
        ho_ref[pl.ds(1, L2), :] = h1o

        cdt = w2_ref.dtype                               # bfloat16
        h1o_prev = ho_ref[pl.ds(0, L2), :].astype(cdt)   # h1[2m-1]
        h1e_next = he_ref[pl.ds(1, L2), :].astype(cdt)   # h1[2m+2]

        # conv2 (k=4, s=2, p=1) + LeakyReLU: 4 tap matmuls, f32 accumulation.
        h2 = leaky(dot(h1o_prev, w2_ref[0])
                   + dot(h1e.astype(cdt), w2_ref[1])
                   + dot(h1o.astype(cdt), w2_ref[2])
                   + dot(h1e_next, w2_ref[3])
                   + b2_ref[...])                        # (L2, O) f32

        # Linear; output width padded to a multiple of 128 -> lane-dense store.
        y = dot(h2.astype(wl_ref.dtype), wl_ref[...]) + bl_ref[...]
        o_ref[0] = y.astype(o_ref.dtype)

    return kernel


# -----------------------------------------------------------------------------
# One-time parameter preparation (hoisted out of the forward pass)
# -----------------------------------------------------------------------------
def prepare_params(params, lane_pad=128):
    w1, b1 = params["w1"], params["b1"]        # (H, C, 4), (H,)   PyTorch layout
    w2, b2 = params["w2"], params["b2"]        # (O, H, 4), (O,)
    wl, bl = params["w_lin"], params["b_lin"]  # (n_out, O), (n_out,)
    H, C, K = w1.shape
    O = w2.shape[0]
    n_out = wl.shape[0]
    assert K == 4 and w2.shape[1] == H and wl.shape[1] == O
    Op = _round_up(n_out, lane_pad)

    # conv1 weights -> tap-major flat matrix (row k*C + c), bf16.
    w1p = jnp.transpose(w1, (2, 1, 0)).reshape(K * C, H).astype(jnp.bfloat16)
    # conv2 weights -> per-tap (H, O) matrices, bf16.
    w2p = jnp.transpose(w2, (2, 1, 0)).astype(jnp.bfloat16)        # (4, H, O)
    # Linear weight/bias padded to lane-dense output width.
    wlp = jnp.zeros((O, Op), jnp.float32).at[:, :n_out].set(wl.T).astype(jnp.bfloat16)
    blp = jnp.zeros((1, Op), jnp.float32).at[:, :n_out].set(bl)

    return dict(w1p=w1p, w2p=w2p, wlp=wlp,
                b1=b1.reshape(1, H).astype(jnp.float32),
                b2=b2.reshape(1, O).astype(jnp.float32),
                blp=blp, C=C, H=H, O=O, Op=Op, n_out=n_out)


# -----------------------------------------------------------------------------
# Forward
# -----------------------------------------------------------------------------
def move_model_forward(x_btc, prep, slope=0.2):
    """x_btc: (B, T, input_size) -> (B, T//4, out_features) float32."""
    B, T, C = x_btc.shape
    assert C == prep["C"], (C, prep["C"])
    assert T % 4 == 0, "sequence length must be a multiple of 4"
    L2 = T // 4
    H, O, Op = prep["H"], prep["O"], prep["Op"]

    # Grouped conv1 windows (no gathers, only pad + reshape), bf16:
    #   xa[m] = [xp[4m]   .. xp[4m+3]]  (window of h1[2m]);  xp = pad-1 input
    #   xb[m] = [xp[4m+2] .. xp[4m+5]]  (window of h1[2m+1])
    xb16 = x_btc.astype(jnp.bfloat16)
    xa = jnp.pad(xb16, ((0, 0), (1, 3), (0, 0))).reshape(B, L2 + 1, 4 * C)[:, :L2]
    xb = jnp.pad(xb16[:, 1:, :], ((0, 0), (0, 1), (0, 0))).reshape(B, L2, 4 * C)
    x_both = jnp.stack([xa, xb], axis=1)                  # (B, 2, L2, 4C)

    out = pl.pallas_call(
        _fused_move_kernel(slope),
        out_shape=jax.ShapeDtypeStruct((B, L2, Op), jnp.float32),
        grid_spec=pltpu.PrefetchScalarGridSpec(
            num_scalar_prefetch=0,
            grid=(B,),
            in_specs=[
                pl.BlockSpec((1, 2, L2, 4 * C), lambda b: (b, 0, 0, 0)),  # x
                pl.BlockSpec((4 * C, H), lambda b: (0, 0)),               # w1p
                pl.BlockSpec((4, H, O), lambda b: (0, 0, 0)),             # w2p
                pl.BlockSpec((O, Op), lambda b: (0, 0)),                  # wlp
                pl.BlockSpec((1, H), lambda b: (0, 0)),                   # b1
                pl.BlockSpec((1, O), lambda b: (0, 0)),                   # b2
                pl.BlockSpec((1, Op), lambda b: (0, 0)),                  # blp
            ],
            out_specs=pl.BlockSpec((1, L2, Op), lambda b: (b, 0, 0)),
            scratch_shapes=[
                pltpu.VMEM((L2 + 1, H), jnp.float32),    # even conv1 rows + zero halo
                pltpu.VMEM((L2 + 1, H), jnp.float32),    # odd  conv1 rows + zero halo
            ],
        ),
        compiler_params=pltpu.CompilerParams(
            dimension_semantics=("parallel",),
            vmem_limit_bytes=32 * 1024 * 1024,
        ),
    )(x_both, prep["w1p"], prep["w2p"], prep["wlp"],
      prep["b1"], prep["b2"], prep["blp"])

    return out[:, :, :prep["n_out"]]


# -----------------------------------------------------------------------------
# Pure-JAX f32 reference (for correctness check only; may use gather)
# -----------------------------------------------------------------------------
def _conv1d_ref(x_btc, w_ock, b_o, stride=2, pad=1):
    xp = jnp.pad(x_btc, ((0, 0), (pad, pad), (0, 0)))
    K = w_ock.shape[2]
    L = (xp.shape[1] - K) // stride + 1
    idx = stride * jnp.arange(L)[:, None] + jnp.arange(K)[None, :]
    patches = xp[:, idx, :]                           # (B, L, K, C)
    return jnp.einsum("blkc,ock->blo", patches, w_ock) + b_o


def _leaky(x, s=0.2):
    return jnp.where(x >= 0, x, s * x)


def move_model_ref(x_btc, p):
    h = _leaky(_conv1d_ref(x_btc, p["w1"], p["b1"]))
    h = _leaky(_conv1d_ref(h, p["w2"], p["b2"]))
    return jnp.einsum("blo,po->blp", h, p["w_lin"]) + p["b_lin"]


# -----------------------------------------------------------------------------
if __name__ == "__main__":
    # Small shapes consistent with the module (input_size=32, hidden=64, out=64)
    B, T = 2, 16
    input_size, hidden_size, output_size = 32, 64, 64
    K = 4  # conv kernel width

    key = jax.random.PRNGKey(0)
    k0, k1, k2, k3, k4, k5, k6 = jax.random.split(key, 7)

    params = {
        # Conv1d weights in PyTorch layout (out_ch, in_ch, kernel)
        "w1": 0.05 * jax.random.normal(k1, (hidden_size, input_size, K), jnp.float32),
        "b1": 0.05 * jax.random.normal(k2, (hidden_size,), jnp.float32),
        "w2": 0.05 * jax.random.normal(k3, (output_size, hidden_size, K), jnp.float32),
        "b2": 0.05 * jax.random.normal(k4, (output_size,), jnp.float32),
        # Linear weight in PyTorch layout (out_features, in_features)
        "w_lin": 0.05 * jax.random.normal(k5, (output_size, output_size), jnp.float32),
        "b_lin": 0.05 * jax.random.normal(k6, (output_size,), jnp.float32),
    }

    x = jax.random.normal(k0, (B, T, input_size), jnp.float32)

    prep = prepare_params(params)                       # one-time weight prep
    fwd = jax.jit(lambda xx: move_model_forward(xx, prep))

    out = jax.block_until_ready(fwd(x))
    ref = jax.block_until_ready(move_model_ref(x, params))

    assert out.shape == (B, T // 4, output_size), out.shape
    # bf16 matmul operands with f32 accumulation -> loosened tolerance.
    err = float(jnp.max(jnp.abs(out - ref)))
    assert err < 3e-2, err

    print("KERNEL_OK")
</pallas_src>

<mosaic_0001>
module attributes {stable_mosaic.version = 11 : i64} {
  func.func @kernel(%arg0: i32, %arg1: memref<1x2x4x128xbf16, #tpu.memory_space<vmem>>, %arg2: memref<128x64xbf16, #tpu.memory_space<vmem>>, %arg3: memref<4x64x64xbf16, #tpu.memory_space<vmem>>, %arg4: memref<64x128xbf16, #tpu.memory_space<vmem>>, %arg5: memref<1x64xf32, #tpu.memory_space<vmem>>, %arg6: memref<1x64xf32, #tpu.memory_space<vmem>>, %arg7: memref<1x128xf32, #tpu.memory_space<vmem>>, %arg8: memref<1x4x128xf32, #tpu.memory_space<vmem>>, %arg9: memref<5x64xf32, #tpu.memory_space<vmem>>, %arg10: memref<5x64xf32, #tpu.memory_space<vmem>>) attributes {dimension_semantics = [#tpu.dimension_semantics<parallel>], iteration_bounds = array<i64: 2>, scalar_prefetch = 0 : i64, scratch_operands = 2 : i64, tpu.core_type = #tpu.core_type<tc>, window_params = [{transform_indices = @transform_0, window_bounds = array<i64: 1, 2, 4, 128>}, {pipeline_mode = #tpu.pipeline_mode<synchronous>, transform_indices = @transform_1, window_bounds = array<i64: 128, 64>}, {pipeline_mode = #tpu.pipeline_mode<synchronous>, transform_indices = @transform_2, window_bounds = array<i64: 4, 64, 64>}, {pipeline_mode = #tpu.pipeline_mode<synchronous>, transform_indices = @transform_3, window_bounds = array<i64: 64, 128>}, {pipeline_mode = #tpu.pipeline_mode<synchronous>, transform_indices = @transform_4, window_bounds = array<i64: 1, 64>}, {pipeline_mode = #tpu.pipeline_mode<synchronous>, transform_indices = @transform_5, window_bounds = array<i64: 1, 64>}, {pipeline_mode = #tpu.pipeline_mode<synchronous>, transform_indices = @transform_6, window_bounds = array<i64: 1, 128>}, {transform_indices = @transform_7, window_bounds = array<i64: 1, 4, 128>}]} {
    %c0 = arith.constant 0 : index
    %c0_0 = arith.constant 0 : index
    %0 = vector.load %arg2[%c0, %c0_0] : memref<128x64xbf16, #tpu.memory_space<vmem>>, vector<128x64xbf16>
    %c0_1 = arith.constant 0 : index
    %c0_2 = arith.constant 0 : index
    %1 = vector.load %arg5[%c0_1, %c0_2] : memref<1x64xf32, #tpu.memory_space<vmem>>, vector<1x64xf32>
    %c0_3 = arith.constant 0 : index
    %c0_4 = arith.constant 0 : index
    %c0_5 = arith.constant 0 : index
    %c0_6 = arith.constant 0 : index
    %2 = vector.load %arg1[%c0_3, %c0_4, %c0_5, %c0_6] : memref<1x2x4x128xbf16, #tpu.memory_space<vmem>>, vector<1x1x4x128xbf16>
    %3 = vector.shape_cast %2 : vector<1x1x4x128xbf16> to vector<4x128xbf16>
    %cst = arith.constant dense<0.000000e+00> : vector<4x64xf32>
    %4 = tpu.matmul %3, %0, %cst {dimension_numbers = #tpu.dot_dimension_numbers<[1], [0], [0], [1], [0, 0, 1, 1], [], []>} : vector<4x128xbf16>, vector<128x64xbf16>, vector<4x64xf32> -> vector<4x64xf32>
    %5 = vector.broadcast %1 : vector<1x64xf32> to vector<4x64xf32>
    %6 = arith.addf %4, %5 : vector<4x64xf32>
    %cst_7 = arith.constant 0.000000e+00 : f32
    %7 = vector.broadcast %cst_7 : f32 to vector<4x64xf32>
    %8 = arith.cmpf oge, %6, %7 : vector<4x64xf32>
    %cst_8 = arith.constant 2.000000e-01 : f32
    %9 = vector.broadcast %cst_8 : f32 to vector<4x64xf32>
    %10 = arith.mulf %9, %6 : vector<4x64xf32>
    %11 = arith.select %8, %6, %10 : vector<4x64xi1>, vector<4x64xf32>
    %c0_9 = arith.constant 0 : index
    %c1 = arith.constant 1 : index
    %c0_10 = arith.constant 0 : index
    %c0_11 = arith.constant 0 : index
    %12 = vector.load %arg1[%c0_9, %c1, %c0_10, %c0_11] : memref<1x2x4x128xbf16, #tpu.memory_space<vmem>>, vector<1x1x4x128xbf16>
    %13 = vector.shape_cast %12 : vector<1x1x4x128xbf16> to vector<4x128xbf16>
    %cst_12 = arith.constant dense<0.000000e+00> : vector<4x64xf32>
    %14 = tpu.matmul %13, %0, %cst_12 {dimension_numbers = #tpu.dot_dimension_numbers<[1], [0], [0], [1], [0, 0, 1, 1], [], []>} : vector<4x128xbf16>, vector<128x64xbf16>, vector<4x64xf32> -> vector<4x64xf32>
    %15 = vector.broadcast %1 : vector<1x64xf32> to vector<4x64xf32>
    %16 = arith.addf %14, %15 : vector<4x64xf32>
    %cst_13 = arith.constant 0.000000e+00 : f32
    %17 = vector.broadcast %cst_13 : f32 to vector<4x64xf32>
    %18 = arith.cmpf oge, %16, %17 : vector<4x64xf32>
    %cst_14 = arith.constant 2.000000e-01 : f32
    %19 = vector.broadcast %cst_14 : f32 to vector<4x64xf32>
    %20 = arith.mulf %19, %16 : vector<4x64xf32>
    %21 = arith.select %18, %16, %20 : vector<4x64xi1>, vector<4x64xf32>
    %cst_15 = arith.constant 0.000000e+00 : f32
    %22 = vector.broadcast %cst_15 : f32 to vector<1x64xf32>
    %c0_16 = arith.constant 0 : index
    %c0_17 = arith.constant 0 : index
    %23 = vector.load %arg9[%c0_16, %c0_17] : memref<5x64xf32, #tpu.memory_space<vmem>>, vector<4x64xf32>
    tpu.vector_store %arg9[%c0_16, %c0_17], %11 {strides = array<i32>} : memref<5x64xf32, #tpu.memory_space<vmem>>, vector<4x64xf32>,
    %c4 = arith.constant 4 : index
    %c0_18 = arith.constant 0 : index
    %24 = vector.load %arg9[%c4, %c0_18] : memref<5x64xf32, #tpu.memory_space<vmem>>, vector<1x64xf32>
    tpu.vector_store %arg9[%c4, %c0_18], %22 {strides = array<i32>} : memref<5x64xf32, #tpu.memory_space<vmem>>, vector<1x64xf32>,
    %c0_19 = arith.constant 0 : index
    %c0_20 = arith.constant 0 : index
    %25 = vector.load %arg10[%c0_19, %c0_20] : memref<5x64xf32, #tpu.memory_space<vmem>>, vector<1x64xf32>
    tpu.vector_store %arg10[%c0_19, %c0_20], %22 {strides = array<i32>} : memref<5x64xf32, #tpu.memory_space<vmem>>, vector<1x64xf32>,
    %c1_21 = arith.constant 1 : index
    %c0_22 = arith.constant 0 : index
    %26 = vector.load %arg10[%c1_21, %c0_22] : memref<5x64xf32, #tpu.memory_space<vmem>>, vector<4x64xf32>
    tpu.vector_store %arg10[%c1_21, %c0_22], %21 {strides = array<i32>} : memref<5x64xf32, #tpu.memory_space<vmem>>, vector<4x64xf32>,
    %c0_23 = arith.constant 0 : index
    %c0_24 = arith.constant 0 : index
    %27 = vector.load %arg10[%c0_23, %c0_24] : memref<5x64xf32, #tpu.memory_space<vmem>>, vector<4x64xf32>
    %28 = arith.truncf %27 : vector<4x64xf32> to vector<4x64xbf16>
    %c1_25 = arith.constant 1 : index
    %c0_26 = arith.constant 0 : index
    %29 = vector.load %arg9[%c1_25, %c0_26] : memref<5x64xf32, #tpu.memory_space<vmem>>, vector<4x64xf32>
    %30 = arith.truncf %29 : vector<4x64xf32> to vector<4x64xbf16>
    %c0_27 = arith.constant 0 : index
    %c0_28 = arith.constant 0 : index
    %c0_29 = arith.constant 0 : index
    %31 = vector.load %arg3[%c0_27, %c0_28, %c0_29] : memref<4x64x64xbf16, #tpu.memory_space<vmem>>, vector<1x64x64xbf16>
    %32 = vector.shape_cast %31 : vector<1x64x64xbf16> to vector<64x64xbf16>
    %cst_30 = arith.constant dense<0.000000e+00> : vector<4x64xf32>
    %33 = tpu.matmul %28, %32, %cst_30 {dimension_numbers = #tpu.dot_dimension_numbers<[1], [0], [0], [1], [0, 0, 1, 1], [], []>} : vector<4x64xbf16>, vector<64x64xbf16>, vector<4x64xf32> -> vector<4x64xf32>
    %34 = arith.truncf %11 : vector<4x64xf32> to vector<4x64xbf16>
    %c1_31 = arith.constant 1 : index
    %c0_32 = arith.constant 0 : index
    %c0_33 = arith.constant 0 : index
    %35 = vector.load %arg3[%c1_31, %c0_32, %c0_33] : memref<4x64x64xbf16, #tpu.memory_space<vmem>>, vector<1x64x64xbf16>
    %36 = vector.shape_cast %35 : vector<1x64x64xbf16> to vector<64x64xbf16>
    %cst_34 = arith.constant dense<0.000000e+00> : vector<4x64xf32>
    %37 = tpu.matmul %34, %36, %cst_34 {dimension_numbers = #tpu.dot_dimension_numbers<[1], [0], [0], [1], [0, 0, 1, 1], [], []>} : vector<4x64xbf16>, vector<64x64xbf16>, vector<4x64xf32> -> vector<4x64xf32>
    %38 = arith.addf %33, %37 : vector<4x64xf32>
    %39 = arith.truncf %21 : vector<4x64xf32> to vector<4x64xbf16>
    %c2 = arith.constant 2 : index
    %c0_35 = arith.constant 0 : index
    %c0_36 = arith.constant 0 : index
    %40 = vector.load %arg3[%c2, %c0_35, %c0_36] : memref<4x64x64xbf16, #tpu.memory_space<vmem>>, vector<1x64x64xbf16>
    %41 = vector.shape_cast %40 : vector<1x64x64xbf16> to vector<64x64xbf16>
    %cst_37 = arith.constant dense<0.000000e+00> : vector<4x64xf32>
    %42 = tpu.matmul %39, %41, %cst_37 {dimension_numbers = #tpu.dot_dimension_numbers<[1], [0], [0], [1], [0, 0, 1, 1], [], []>} : vector<4x64xbf16>, vector<64x64xbf16>, vector<4x64xf32> -> vector<4x64xf32>
    %43 = arith.addf %38, %42 : vector<4x64xf32>
    %c3 = arith.constant 3 : index
    %c0_38 = arith.constant 0 : index
    %c0_39 = arith.constant 0 : index
    %44 = vector.load %arg3[%c3, %c0_38, %c0_39] : memref<4x64x64xbf16, #tpu.memory_space<vmem>>, vector<1x64x64xbf16>
    %45 = vector.shape_cast %44 : vector<1x64x64xbf16> to vector<64x64xbf16>
    %cst_40 = arith.constant dense<0.000000e+00> : vector<4x64xf32>
    %46 = tpu.matmul %30, %45, %cst_40 {dimension_numbers = #tpu.dot_dimension_numbers<[1], [0], [0], [1], [0, 0, 1, 1], [], []>} : vector<4x64xbf16>, vector<64x64xbf16>, vector<4x64xf32> -> vector<4x64xf32>
    %47 = arith.addf %43, %46 : vector<4x64xf32>
    %c0_41 = arith.constant 0 : index
    %c0_42 = arith.constant 0 : index
    %48 = vector.load %arg6[%c0_41, %c0_42] : memref<1x64xf32, #tpu.memory_space<vmem>>, vector<1x64xf32>
    %49 = vector.broadcast %48 : vector<1x64xf32> to vector<4x64xf32>
    %50 = arith.addf %47, %49 : vector<4x64xf32>
    %cst_43 = arith.constant 0.000000e+00 : f32
    %51 = vector.broadcast %cst_43 : f32 to vector<4x64xf32>
    %52 = arith.cmpf oge, %50, %51 : vector<4x64xf32>
    %cst_44 = arith.constant 2.000000e-01 : f32
    %53 = vector.broadcast %cst_44 : f32 to vector<4x64xf32>
    %54 = arith.mulf %53, %50 : vector<4x64xf32>
    %55 = arith.select %52, %50, %54 : vector<4x64xi1>, vector<4x64xf32>
    %56 = arith.truncf %55 : vector<4x64xf32> to vector<4x64xbf16>
    %c0_45 = arith.constant 0 : index
    %c0_46 = arith.constant 0 : index
    %57 = vector.load %arg4[%c0_45, %c0_46] : memref<64x128xbf16, #tpu.memory_space<vmem>>, vector<64x128xbf16>
    %cst_47 = arith.constant dense<0.000000e+00> : vector<4x128xf32>
    %58 = tpu.matmul %56, %57, %cst_47 {dimension_numbers = #tpu.dot_dimension_numbers<[1], [0], [0], [1], [0, 0, 1, 1], [], []>} : vector<4x64xbf16>, vector<64x128xbf16>, vector<4x128xf32> -> vector<4x128xf32>
    %c0_48 = arith.constant 0 : index
    %c0_49 = arith.constant 0 : index
    %59 = vector.load %arg7[%c0_48, %c0_49] : memref<1x128xf32, #tpu.memory_space<vmem>>, vector<1x128xf32>
    %60 = vector.broadcast %59 : vector<1x128xf32> to vector<4x128xf32>
    %61 = arith.addf %58, %60 : vector<4x128xf32>
    %c0_50 = arith.constant 0 : index
    %c0_51 = arith.constant 0 : index
    %c0_52 = arith.constant 0 : index
    %62 = vector.load %arg8[%c0_50, %c0_51, %c0_52] : memref<1x4x128xf32, #tpu.memory_space<vmem>>, vector<1x4x128xf32>
    %63 = vector.shape_cast %62 : vector<1x4x128xf32> to vector<4x128xf32>
    %64 = vector.shape_cast %61 : vector<4x128xf32> to vector<1x4x128xf32>
    tpu.vector_store %arg8[%c0_50, %c0_51, %c0_52], %64 {strides = array<i32>} : memref<1x4x128xf32, #tpu.memory_space<vmem>>, vector<1x4x128xf32>,
    return
  }
  func.func @transform_0(%arg0: i32) -> (i32, i32, i32, i32) {
    %c0_i32 = arith.constant 0 : i32
    %c0_i32_0 = arith.constant 0 : i32
    %c0_i32_1 = arith.constant 0 : i32
    %c0_i32_2 = arith.constant 0 : i32
    return %arg0, %c0_i32, %c0_i32_0, %c0_i32_1 : i32, i32, i32, i32
  }
  func.func @transform_1(%arg0: i32) -> (i32, i32) {
    %c0_i32 = arith.constant 0 : i32
    %c0_i32_0 = arith.constant 0 : i32
    %c0_i32_1 = arith.constant 0 : i32
    return %c0_i32, %c0_i32_0 : i32, i32
  }
  func.func @transform_2(%arg0: i32) -> (i32, i32, i32) {
    %c0_i32 = arith.constant 0 : i32
    %c0_i32_0 = arith.constant 0 : i32
    %c0_i32_1 = arith.constant 0 : i32
    %c0_i32_2 = arith.constant 0 : i32
    return %c0_i32, %c0_i32_0, %c0_i32_1 : i32, i32, i32
  }
  func.func @transform_3(%arg0: i32) -> (i32, i32) {
    %c0_i32 = arith.constant 0 : i32
    %c0_i32_0 = arith.constant 0 : i32
    %c0_i32_1 = arith.constant 0 : i32
    return %c0_i32, %c0_i32_0 : i32, i32
  }
  func.func @transform_4(%arg0: i32) -> (i32, i32) {
    %c0_i32 = arith.constant 0 : i32
    %c0_i32_0 = arith.constant 0 : i32
    %c0_i32_1 = arith.constant 0 : i32
    return %c0_i32, %c0_i32_0 : i32, i32
  }
  func.func @transform_5(%arg0: i32) -> (i32, i32) {
    %c0_i32 = arith.constant 0 : i32
    %c0_i32_0 = arith.constant 0 : i32
    %c0_i32_1 = arith.constant 0 : i32
    return %c0_i32, %c0_i32_0 : i32, i32
  }
  func.func @transform_6(%arg0: i32) -> (i32, i32) {
    %c0_i32 = arith.constant 0 : i32
    %c0_i32_0 = arith.constant 0 : i32
    %c0_i32_1 = arith.constant 0 : i32
    return %c0_i32, %c0_i32_0 : i32, i32
  }
  func.func @transform_7(%arg0: i32) -> (i32, i32, i32) {
    %c0_i32 = arith.constant 0 : i32
    %c0_i32_0 = arith.constant 0 : i32
    %c0_i32_1 = arith.constant 0 : i32
    return %arg0, %c0_i32, %c0_i32_0 : i32, i32, i32
  }
}

</mosaic_0001>

<llo_original>
// kernel: _lambda_.1
$region0: #{_lambda_.1}
  #allocation0 [shape = 'u32[]', space=smem, size = 0x4, offset = 0x4, fixed_abs, tag = 'smem constant byte address 0x4 - core index']
  #allocation1 [shape = 'u32[144,128]{1,0:T(1,128)}', space=vmem, size = 0x12000, scoped, tag = 'internal scratch']
  #allocation2 [shape = 'f32[5,64]{1,0:T(8,128)}', space=vmem, size = 0x1000, scoped, tag = 'scratch operand']
  #allocation3 [shape = 'f32[5,64]{1,0:T(8,128)}', space=vmem, size = 0x1000, scoped, tag = 'scratch operand']
  %s0 = inlined_call_operand.vmem [shape: bf16[2,2,4,128], index: 0, kind: input, shape index: {}]
  %s1 = inlined_call_operand.vmem [shape: bf16[128,64], index: 1, kind: input, shape index: {}]
  %s2 = inlined_call_operand.vmem [shape: bf16[4,64,64], index: 2, kind: input, shape index: {}]
  %s3 = inlined_call_operand.vmem [shape: bf16[64,128], index: 3, kind: input, shape index: {}]
  %s4 = inlined_call_operand.vmem [shape: f32[1,64], index: 4, kind: input, shape index: {}]
  %s5 = inlined_call_operand.vmem [shape: f32[1,64], index: 5, kind: input, shape index: {}]
  %s6 = inlined_call_operand.vmem [shape: f32[1,128], index: 6, kind: input, shape index: {}]
  %s7 = inlined_call_operand.hbm [shape: f32[2,4,128], index: 7, kind: output, shape index: {}]
  %s8 = sld [smem:[#allocation0]]
  $region61: #{_lambda_.1} parent=0
    _
  %s10 = ssub.s32 1, %s8
  %s11 = scalar_select 0, %s10, %s8
  $region1: #{_lambda_.1} parent=0
    #allocation4 [shape = 'u8[4096]{0}', space=vmem, size = 0x1000, scoped, tag = 'output window, operand 0']
    #allocation5 [shape = 's32[2]{0}', space=sflag, size = 0x8, scoped, tag = 'scoped memory for _lambda_.1']
    %12 = vsyncpa [#allocation5], 0
    %s13 = scalar_lea.sflag [#allocation5], 1
    %14 = vsyncpa %s13, 0
    loop: start=0, step=1, limit=4
    $region2: #{_lambda_.1} parent=1 // loop_pre_header
      _
    $region3: #{_lambda_.1} parent=1 // loop_header
      %s16 = sphi 0, %s20
      %p17 = scmp.ge.s32.totalorder %s16, 4
      %s26 = sphi 0, %s28
      %s29 = sphi 0, %s26
      %s30 = sphi 0, %s29
      %s46 = sphi 0, %s30
      %s50 = sphi 0, %s50
      %s52 = sphi 0, %s50
      %s53 = sphi 0, %s52
      %s67 = sphi 0, %s53
      %s71 = sphi 0, %s71
      %s73 = sphi 0, %s71
      %s74 = sphi 0, %s73
      %s88 = sphi 0, %s74
      %s92 = sphi 0, %s92
      %s94 = sphi 0, %s92
      %s95 = sphi 0, %s94
      %s109 = sphi 0, %s95
      %s113 = sphi 0, %s113
      %s115 = sphi 0, %s113
      %s116 = sphi 0, %s115
      %s130 = sphi 0, %s116
      %s134 = sphi 0, %s134
      %s136 = sphi 0, %s134
      %s137 = sphi 0, %s136
      %s151 = sphi 0, %s137
      %s155 = sphi 0, %s155
      %s157 = sphi 0, %s155
      %s158 = sphi 0, %s157
      %s172 = sphi 0, %s158
      %s178 = sphi 0, %s180
      %s181 = sphi 0, %s178
      %s182 = sphi 0, %s181
      %s198 = sphi 0, %s182
    $region4: #{_lambda_.1} parent=1 // loop_header_branch
      %19 = sbr.rel (%p17) target = $region8
    $region5: #{_lambda_.1} parent=1 // loop_body
      %s21 = ssub.s32 %s16, 1
      %s22 = ssub.s32 %s16, 2
      %s23 = sadd.s32 %s16, 1
      %s24 = ssub.s32 %s16, %s23
      %p25 = scmp.eq.s32.totalorder %s24, 0
      %s27 = sadd.s32 %s26, 1
      %s28 = scalar_select %p25, %s26, %s27
      %p31 = pneg %p25
      %p32 = scmp.eq.s32.totalorder %s16, 1
      %p33 = por %p31, %p32
      %p34 = scmp.ne.s32.totalorder %s26, %s29
      %p35 = scmp.eq.s32.totalorder %s16, 0
      %p36 = por %p34, %p35
      %p37 = scmp.ne.s32.totalorder %s26, %s29
      %p38 = scmp.eq.s32.totalorder %s21, 1
      %p39 = por %p37, %p38
      %p40 = scmp.ne.s32.totalorder %s29, %s30
      %p41 = scmp.eq.s32.totalorder %s21, 0
      %p42 = por %p40, %p41
      %p43 = scmp.ne.s32.totalorder %s29, %s30
      %p44 = scmp.eq.s32.totalorder %s22, 1
      %p45 = por %p43, %p44
      %p47 = scmp.ne.s32.totalorder %s30, %s46
      %p48 = scmp.eq.s32.totalorder %s22, 0
      %p49 = por %p47, %p48
      %s51 = sadd.s32 %s50, 1
      %p54 = scmp.eq.s32.totalorder %s16, 1
      %p55 = scmp.ne.s32.totalorder %s50, %s52
      %p56 = scmp.eq.s32.totalorder %s16, 0
      %p57 = por %p55, %p56
      %p58 = scmp.ne.s32.totalorder %s50, %s52
      %p59 = scmp.eq.s32.totalorder %s21, 1
      %p60 = por %p58, %p59
      %p61 = scmp.ne.s32.totalorder %s52, %s53
      %p62 = scmp.eq.s32.totalorder %s21, 0
      %p63 = por %p61, %p62
      %p64 = scmp.ne.s32.totalorder %s52, %s53
      %p65 = scmp.eq.s32.totalorder %s22, 1
      %p66 = por %p64, %p65
      %p68 = scmp.ne.s32.totalorder %s53, %s67
      %p69 = scmp.eq.s32.totalorder %s22, 0
      %p70 = por %p68, %p69
      %s72 = sadd.s32 %s71, 1
      %p75 = scmp.eq.s32.totalorder %s16, 1
      %p76 = scmp.ne.s32.totalorder %s71, %s73
      %p77 = scmp.eq.s32.totalorder %s16, 0
      %p78 = por %p76, %p77
      %p79 = scmp.ne.s32.totalorder %s71, %s73
      %p80 = scmp.eq.s32.totalorder %s21, 1
      %p81 = por %p79, %p80
      %p82 = scmp.ne.s32.totalorder %s73, %s74
      %p83 = scmp.eq.s32.totalorder %s21, 0
      %p84 = por %p82, %p83
      %p85 = scmp.ne.s32.totalorder %s73, %s74
      %p86 = scmp.eq.s32.totalorder %s22, 1
      %p87 = por %p85, %p86
      %p89 = scmp.ne.s32.totalorder %s74, %s88
      %p90 = scmp.eq.s32.totalorder %s22, 0
      %p91 = por %p89, %p90
      %s93 = sadd.s32 %s92, 1
      %p96 = scmp.eq.s32.totalorder %s16, 1
      %p97 = scmp.ne.s32.totalorder %s92, %s94
      %p98 = scmp.eq.s32.totalorder %s16, 0
      %p99 = por %p97, %p98
      %p100 = scmp.ne.s32.totalorder %s92, %s94
      %p101 = scmp.eq.s32.totalorder %s21, 1
      %p102 = por %p100, %p101
      %p103 = scmp.ne.s32.totalorder %s94, %s95
      %p104 = scmp.eq.s32.totalorder %s21, 0
      %p105 = por %p103, %p104
      %p106 = scmp.ne.s32.totalorder %s94, %s95
      %p107 = scmp.eq.s32.totalorder %s22, 1
      %p108 = por %p106, %p107
      %p110 = scmp.ne.s32.totalorder %s95, %s109
      %p111 = scmp.eq.s32.totalorder %s22, 0
      %p112 = por %p110, %p111
      %s114 = sadd.s32 %s113, 1
      %p117 = scmp.eq.s32.totalorder %s16, 1
      %p118 = scmp.ne.s32.totalorder %s113, %s115
      %p119 = scmp.eq.s32.totalorder %s16, 0
      %p120 = por %p118, %p119
      %p121 = scmp.ne.s32.totalorder %s113, %s115
      %p122 = scmp.eq.s32.totalorder %s21, 1
      %p123 = por %p121, %p122
      %p124 = scmp.ne.s32.totalorder %s115, %s116
      %p125 = scmp.eq.s32.totalorder %s21, 0
      %p126 = por %p124, %p125
      %p127 = scmp.ne.s32.totalorder %s115, %s116
      %p128 = scmp.eq.s32.totalorder %s22, 1
      %p129 = por %p127, %p128
      %p131 = scmp.ne.s32.totalorder %s116, %s130
      %p132 = scmp.eq.s32.totalorder %s22, 0
      %p133 = por %p131, %p132
      %s135 = sadd.s32 %s134, 1
      %p138 = scmp.eq.s32.totalorder %s16, 1
      %p139 = scmp.ne.s32.totalorder %s134, %s136
      %p140 = scmp.eq.s32.totalorder %s16, 0
      %p141 = por %p139, %p140
      %p142 = scmp.ne.s32.totalorder %s134, %s136
      %p143 = scmp.eq.s32.totalorder %s21, 1
      %p144 = por %p142, %p143
      %p145 = scmp.ne.s32.totalorder %s136, %s137
      %p146 = scmp.eq.s32.totalorder %s21, 0
      %p147 = por %p145, %p146
      %p148 = scmp.ne.s32.totalorder %s136, %s137
      %p149 = scmp.eq.s32.totalorder %s22, 1
      %p150 = por %p148, %p149
      %p152 = scmp.ne.s32.totalorder %s137, %s151
      %p153 = scmp.eq.s32.totalorder %s22, 0
      %p154 = por %p152, %p153
      %s156 = sadd.s32 %s155, 1
      %p159 = scmp.eq.s32.totalorder %s16, 1
      %p160 = scmp.ne.s32.totalorder %s155, %s157
      %p161 = scmp.eq.s32.totalorder %s16, 0
      %p162 = por %p160, %p161
      %p163 = scmp.ne.s32.totalorder %s155, %s157
      %p164 = scmp.eq.s32.totalorder %s21, 1
      %p165 = por %p163, %p164
      %p166 = scmp.ne.s32.totalorder %s157, %s158
      %p167 = scmp.eq.s32.totalorder %s21, 0
      %p168 = por %p166, %p167
      %p169 = scmp.ne.s32.totalorder %s157, %s158
      %p170 = scmp.eq.s32.totalorder %s22, 1
      %p171 = por %p169, %p170
      %p173 = scmp.ne.s32.totalorder %s158, %s172
      %p174 = scmp.eq.s32.totalorder %s22, 0
      %p175 = por %p173, %p174
      %s176 = ssub.s32 %s16, %s23
      %p177 = scmp.eq.s32.totalorder %s176, 0
      %s179 = sadd.s32 %s178, 1
      %s180 = scalar_select %p177, %s178, %s179
      %p183 = pneg %p177
      %p184 = scmp.eq.s32.totalorder %s16, 1
      %p185 = por %p183, %p184
      %p186 = scmp.ne.s32.totalorder %s178, %s181
      %p187 = scmp.eq.s32.totalorder %s16, 0
      %p188 = por %p186, %p187
      %p189 = scmp.ne.s32.totalorder %s178, %s181
      %p190 = scmp.eq.s32.totalorder %s21, 1
      %p191 = por %p189, %p190
      %p192 = scmp.ne.s32.totalorder %s181, %s182
      %p193 = scmp.eq.s32.totalorder %s21, 0
      %p194 = por %p192, %p193
      %p195 = scmp.ne.s32.totalorder %s181, %s182
      %p196 = scmp.eq.s32.totalorder %s22, 1
      %p197 = por %p195, %p196
      %p199 = scmp.ne.s32.totalorder %s182, %s198
      %p200 = scmp.eq.s32.totalorder %s22, 0
      %p201 = por %p199, %p200
      %p202 = scmp.le.s32.totalorder 1, %s16
      %p203 = scmp.lt.s32.totalorder %s16, 3
      %p204 = pnand %p202, %p203
      %p205 = pneg %p204
      // Predicated region
      $region9: #{_lambda_.1} parent=5 // pred_check
        _
      $region10: #{_lambda_.1} parent=5 // pred_check_branch
        %207 = sbr.rel (%p204) target = $region12
      $region11: #{_lambda_.1} parent=5 // pred_region
        %s208 = ssub.s32 %s16, 1
        // Predicated region
        $region13: #{_lambda_.1} parent=11 // pred_check
          %p209 = pneg %p63
        $region14: #{_lambda_.1} parent=11 // pred_check_branch
          %211 = sbr.rel (%p209) target = $region16
        $region15: #{_lambda_.1} parent=11 // pred_region
          _
        $region16: #{_lambda_.1} parent=11 // pred_fallthru
          _
        // Predicated region
        $region17: #{_lambda_.1} parent=11 // pred_check
          %p212 = pneg %p84
        $region18: #{_lambda_.1} parent=11 // pred_check_branch
          %214 = sbr.rel (%p212) target = $region20
        $region19: #{_lambda_.1} parent=11 // pred_region
          _
        $region20: #{_lambda_.1} parent=11 // pred_fallthru
          _
        // Predicated region
        $region21: #{_lambda_.1} parent=11 // pred_check
          %p215 = pneg %p105
        $region22: #{_lambda_.1} parent=11 // pred_check_branch
          %217 = sbr.rel (%p215) target = $region24
        $region23: #{_lambda_.1} parent=11 // pred_region
          _
        $region24: #{_lambda_.1} parent=11 // pred_fallthru
          _
        // Predicated region
        $region25: #{_lambda_.1} parent=11 // pred_check
          %p218 = pneg %p126
        $region26: #{_lambda_.1} parent=11 // pred_check_branch
          %220 = sbr.rel (%p218) target = $region28
        $region27: #{_lambda_.1} parent=11 // pred_region
          _
        $region28: #{_lambda_.1} parent=11 // pred_fallthru
          _
        // Predicated region
        $region29: #{_lambda_.1} parent=11 // pred_check
          %p221 = pneg %p147
        $region30: #{_lambda_.1} parent=11 // pred_check_branch
          %223 = sbr.rel (%p221) target = $region32
        $region31: #{_lambda_.1} parent=11 // pred_region
          _
        $region32: #{_lambda_.1} parent=11 // pred_fallthru
          _
        // Predicated region
        $region33: #{_lambda_.1} parent=11 // pred_check
          %p224 = pneg %p168
        $region34: #{_lambda_.1} parent=11 // pred_check_branch
          %226 = sbr.rel (%p224) target = $region36
        $region35: #{_lambda_.1} parent=11 // pred_region
          _
        $region36: #{_lambda_.1} parent=11 // pred_fallthru
          _
      $region12: #{_lambda_.1} parent=5 // pred_fallthru
        _
      %p227 = scmp.lt.s32.totalorder %s16, 2
      // Predicated region
      $region37: #{_lambda_.1} parent=5 // pred_check
        %p228 = pneg %p227
      $region38: #{_lambda_.1} parent=5 // pred_check_branch
        %230 = sbr.rel (%p228) target = $region40
      $region39: #{_lambda_.1} parent=5 // pred_region
        // Predicated region
        $region41: #{_lambda_.1} parent=39 // pred_check
          %p231 = pneg %p36
        $region42: #{_lambda_.1} parent=39 // pred_check_branch
          %233 = sbr.rel (%p231) target = $region44
        $region43: #{_lambda_.1} parent=39 // pred_region
          %p234 = scmp.lt.s32.totalorder %s16, 1
          %s235 = scalar_select %p234, %s16, 1
          %s236 = smul.addr %s235, 2
          %s237 = smul.addr %s236, 2
          %s238 = scalar_lea.vmem %s0, %s237
        $region44: #{_lambda_.1} parent=39 // pred_fallthru
          _
      $region40: #{_lambda_.1} parent=5 // pred_fallthru
        _
      %p239 = scmp.le.s32.totalorder 1, %s16
      %p240 = scmp.lt.s32.totalorder %s16, 3
      %p241 = pnand %p239, %p240
      %p242 = pneg %p241
      // Predicated region
      $region45: #{_lambda_.1} parent=5 // pred_check
        _
      $region46: #{_lambda_.1} parent=5 // pred_check_branch
        %244 = sbr.rel (%p241) target = $region48
      $region47: #{_lambda_.1} parent=5 // pred_region
        %s245 = ssub.s32 %s16, 1
        %p246 = scmp.lt.s32.totalorder %s21, 1
        %s247 = scalar_select %p246, %s21, 1
        %s248 = smul.addr %s247, 2
        %s249 = smul.addr %s248, 2
        %s250 = scalar_lea.vmem %s0, %s249
        %p251 = pneg %p42
        %p252 = pneg %p39
        %p253 = pneg %p63
        %p254 = pneg %p60
        %p255 = pneg %p84
        %p256 = pneg %p81
        %p257 = pneg %p105
        %p258 = pneg %p102
        %p259 = pneg %p126
        %p260 = pneg %p123
        %p261 = pneg %p147
        %p262 = pneg %p144
        %p263 = pneg %p168
        %p264 = pneg %p165
        %p265 = pneg %p194
        %p266 = pneg %p191
        %s267 = sand.u32 %s181, 1
        %s268 = scalar_lea.sflag [#allocation5], %s267
        %s269 = sand.u32 %s181, 1
        %s270 = smul.addr %s269, 4
        %s271 = scalar_lea.vmem [#allocation4], %s270
        %p272 = scmp.lt.s32.totalorder %s21, 1
        %s273 = scalar_select %p272, %s21, 1
        %s274 = smul.addr %s273, 2
        %s275 = smul.addr %s274, 2
        %s276 = scalar_lea.vmem %s0, %s275
        %v278 = vld [vmem:[%s1] sm:$0xf]
        %v279 = vld [vmem:[%s1 + $0x4] sm:$0xf]
        %v280 = vld [vmem:[%s1 + $0x8] sm:$0xf]
        %v281 = vld [vmem:[%s1 + $0xc] sm:$0xf]
        %v282 = vld [vmem:[%s1 + $0x10] sm:$0xf]
        %v283 = vld [vmem:[%s1 + $0x14] sm:$0xf]
        %v284 = vld [vmem:[%s1 + $0x18] sm:$0xf]
        %v285 = vld [vmem:[%s1 + $0x1c] sm:$0xf]
        %v286 = vld [vmem:[%s1 + $0x20] sm:$0xf]
        %v287 = vld [vmem:[%s1 + $0x24] sm:$0xf]
        %v288 = vld [vmem:[%s1 + $0x28] sm:$0xf]
        %v289 = vld [vmem:[%s1 + $0x2c] sm:$0xf]
        %v290 = vld [vmem:[%s1 + $0x30] sm:$0xf]
        %v291 = vld [vmem:[%s1 + $0x34] sm:$0xf]
        %v292 = vld [vmem:[%s1 + $0x38] sm:$0xf]
        %v293 = vld [vmem:[%s1 + $0x3c] sm:$0xf]
        %v294 = vld [vmem:[%s4] sm:$0x1]
        %v295 = vld [vmem:[%s276] sm:$0x3]
        %v297 = vlaneseq
        %v298 = vshrl.u32 %v297, 7
        %v299 = vsub.s32 0, %v298
        %v300 = vrot.slane %v294, %v299
        %v318 = vunpack.c.l.b16 %v278
        %v319 = vunpack.c.l.b16 %v279
        %v320 = vunpack.c.l.b16 %v280
        %v321 = vunpack.c.l.b16 %v281
        %v322 = vunpack.c.l.b16 %v282
        %v323 = vunpack.c.l.b16 %v283
        %v324 = vunpack.c.l.b16 %v284
        %v325 = vunpack.c.l.b16 %v285
        %v326 = vunpack.c.l.b16 %v286
        %v327 = vunpack.c.l.b16 %v287
        %v328 = vunpack.c.l.b16 %v288
        %v329 = vunpack.c.l.b16 %v289
        %v330 = vunpack.c.l.b16 %v290
        %v331 = vunpack.c.l.b16 %v291
        %v332 = vunpack.c.l.b16 %v292
        %v333 = vunpack.c.l.b16 %v293
        %v334 = vpack.c.b16 %v319, %v318
        %v335 = vpack.c.b16 %v321, %v320
        %v336 = vpack.c.b16 %v323, %v322
        %v337 = vpack.c.b16 %v325, %v324
        %v338 = vpack.c.b16 %v327, %v326
        %v339 = vpack.c.b16 %v329, %v328
        %v340 = vpack.c.b16 %v331, %v330
        %v341 = vpack.c.b16 %v333, %v332
        %350 = vmatprep.subr.bf16.mxu0 0
        %351 = vmatpush1.bf16.msra.mxu0 %v334
        %352 = vmatprep.subr.bf16.mxu0 0
        %353 = vmatpush1.bf16.msra.mxu0 %v335
        %354 = vmatprep.subr.bf16.mxu0 0
        %355 = vmatpush1.bf16.msra.mxu0 %v336
        %356 = vmatprep.subr.bf16.mxu0 0
        %357 = vmatpush1.bf16.msra.mxu0 %v337
        %358 = vmatprep.subr.bf16.mxu0 0
        %359 = vmatpush1.bf16.msra.mxu0 %v338
        %360 = vmatprep.subr.bf16.mxu0 0
        %361 = vmatpush1.bf16.msra.mxu0 %v339
        %362 = vmatprep.subr.bf16.mxu0 0
        %363 = vmatpush1.bf16.msra.mxu0 %v340
        %364 = vmatprep.subr.bf16.mxu0 0
        %365 = vmatpush1.bf16.msra.mxu0 %v341
        %366 = vmatprep.subr.bf16.mxu0 0
        %367 = vmatpush1.bf16.msra.mxu0 0
        %368 = vmatprep.subr.bf16.mxu0 0
        %369 = vmatpush1.bf16.msra.mxu0 0
        %370 = vmatprep.subr.bf16.mxu0 0
        %371 = vmatpush1.bf16.msra.mxu0 0
        %372 = vmatprep.subr.bf16.mxu0 0
        %373 = vmatpush1.bf16.msra.mxu0 0
        %374 = vmatprep.subr.bf16.mxu0 0
        %375 = vmatpush1.bf16.msra.mxu0 0
        %376 = vmatprep.subr.bf16.mxu0 0
        %377 = vmatpush1.bf16.msra.mxu0 0
        %378 = vmatprep.subr.bf16.mxu0 0
        %379 = vmatpush1.bf16.msra.mxu0 0
        %380 = vmatprep.subr.bf16.mxu0 0
        %381 = vmatpush1.bf16.msra.mxu0 0
        %382 = vmatprep.mubr.bf16.mxu0 0
        %383 = vmatmul.mubr.bf16.gmra.mrb[0].mxu0 %v295
        %v384 = vpop.f32.mrb[0].mxu0
        %v385 = vadd.f32 %v300, %v384
        %v386 = vpop.f32.mrb[0].mxu0
        %v387 = vpop.f32.mrb[0].mxu0
        %v388 = vpop.f32.mrb[0].mxu0
        %389 = vdwg.mxu0
        %vm390 = vcmp.ge.f32.partialorder %v385, 0.0
        %v391 = vmul.f32 %v385, 0.2
        %v392 = vsel %vm390, %v385, %v391
        %s393 = scalar_lea.vmem %s276, 2
        %v394 = vld [vmem:[%s393] sm:$0x3]
        %395 = vmatprep.subr.bf16.mxu0 0
        %396 = vmatpush1.bf16.msra.mxu0 %v334
        %397 = vmatprep.subr.bf16.mxu0 0
        %398 = vmatpush1.bf16.msra.mxu0 %v335
        %399 = vmatprep.subr.bf16.mxu0 0
        %400 = vmatpush1.bf16.msra.mxu0 %v336
        %401 = vmatprep.subr.bf16.mxu0 0
        %402 = vmatpush1.bf16.msra.mxu0 %v337
        %403 = vmatprep.subr.bf16.mxu0 0
        %404 = vmatpush1.bf16.msra.mxu0 %v338
        %405 = vmatprep.subr.bf16.mxu0 0
        %406 = vmatpush1.bf16.msra.mxu0 %v339
        %407 = vmatprep.subr.bf16.mxu0 0
        %408 = vmatpush1.bf16.msra.mxu0 %v340
        %409 = vmatprep.subr.bf16.mxu0 0
        %410 = vmatpush1.bf16.msra.mxu0 %v341
        %411 = vmatprep.subr.bf16.mxu0 0
        %412 = vmatpush1.bf16.msra.mxu0 0
        %413 = vmatprep.subr.bf16.mxu0 0
        %414 = vmatpush1.bf16.msra.mxu0 0
        %415 = vmatprep.subr.bf16.mxu0 0
        %416 = vmatpush1.bf16.msra.mxu0 0
        %417 = vmatprep.subr.bf16.mxu0 0
        %418 = vmatpush1.bf16.msra.mxu0 0
        %419 = vmatprep.subr.bf16.mxu0 0
        %420 = vmatpush1.bf16.msra.mxu0 0
        %421 = vmatprep.subr.bf16.mxu0 0
        %422 = vmatpush1.bf16.msra.mxu0 0
        %423 = vmatprep.subr.bf16.mxu0 0
        %424 = vmatpush1.bf16.msra.mxu0 0
        %425 = vmatprep.subr.bf16.mxu0 0
        %426 = vmatpush1.bf16.msra.mxu0 0
        %427 = vmatprep.mubr.bf16.mxu0 0
        %428 = vmatmul.mubr.bf16.gmra.mrb[0].mxu0 %v394
        %v429 = vpop.f32.mrb[0].mxu0
        %v430 = vadd.f32 %v300, %v429
        %v431 = vpop.f32.mrb[0].mxu0
        %v432 = vpop.f32.mrb[0].mxu0
        %v433 = vpop.f32.mrb[0].mxu0
        %434 = vdwg.mxu0
        %vm435 = vcmp.ge.f32.partialorder %v430, 0.0
        %v436 = vmul.f32 %v430, 0.2
        %v437 = vsel %vm435, %v430, %v436
        %vm438 = vcmask 519168
        %439 = vst.msk [vmem:[#allocation2] sm:$0xf] %vm438, %v392
        %vm440 = vcmask 516096
        %441 = vst.msk [vmem:[#allocation2 + $0x4] sm:$0x1] %vm440, 0.0
        %442 = vst.msk [vmem:[#allocation3] sm:$0x1] %vm440, 0.0
        %443 = vst.msk [vmem:[#allocation3 + $0x1] sm:$0xf] %vm438, %v437
        %v444 = vld [vmem:[#allocation3] sm:$0xf]
        %v445 = vpack.c.bf16 %v444, %v444
        %v446 = vld [vmem:[#allocation2 + $0x1] sm:$0xf]
        %v447 = vpack.c.bf16 %v446, %v446
        %v448 = vld [vmem:[%s2] sm:$0xf]
        %v449 = vld [vmem:[%s2 + $0x4] sm:$0xf]
        %v450 = vld [vmem:[%s2 + $0x8] sm:$0xf]
        %v451 = vld [vmem:[%s2 + $0xc] sm:$0xf]
        %v452 = vld [vmem:[%s2 + $0x10] sm:$0xf]
        %v453 = vld [vmem:[%s2 + $0x14] sm:$0xf]
        %v454 = vld [vmem:[%s2 + $0x18] sm:$0xf]
        %v455 = vld [vmem:[%s2 + $0x1c] sm:$0xf]
        %v456 = vpack.c.bf16 %v392, %v392
        %s457 = scalar_lea.vmem %s2, 32
        %v458 = vld [vmem:[%s457] sm:$0xf]
        %v459 = vld [vmem:[%s457 + $0x4] sm:$0xf]
        %v460 = vld [vmem:[%s457 + $0x8] sm:$0xf]
        %v461 = vld [vmem:[%s457 + $0xc] sm:$0xf]
        %v462 = vld [vmem:[%s457 + $0x10] sm:$0xf]
        %v463 = vld [vmem:[%s457 + $0x14] sm:$0xf]
        %v464 = vld [vmem:[%s457 + $0x18] sm:$0xf]
        %v465 = vld [vmem:[%s457 + $0x1c] sm:$0xf]
        %v474 = vunpack.c.l.b16 %v458
        %v475 = vunpack.c.l.b16 %v459
        %v476 = vunpack.c.l.b16 %v460
        %v477 = vunpack.c.l.b16 %v461
        %v478 = vunpack.c.l.b16 %v462
        %v479 = vunpack.c.l.b16 %v463
        %v480 = vunpack.c.l.b16 %v464
        %v481 = vunpack.c.l.b16 %v465
        %v482 = vpack.c.b16 %v475, %v474
        %v483 = vpack.c.b16 %v477, %v476
        %v484 = vpack.c.b16 %v479, %v478
        %v485 = vpack.c.b16 %v481, %v480
        %vm490 = vcmask 523264
        %v492 = vsel %vm490, %v456, 0
        %494 = vmatprep.subr.bf16.mxu0 0
        %495 = vmatpush1.bf16.msra.mxu0 %v482
        %496 = vmatprep.subr.bf16.mxu0 0
        %497 = vmatpush1.bf16.msra.mxu0 %v483
        %498 = vmatprep.subr.bf16.mxu0 0
        %499 = vmatpush1.bf16.msra.mxu0 %v484
        %500 = vmatprep.subr.bf16.mxu0 0
        %501 = vmatpush1.bf16.msra.mxu0 %v485
        %502 = vmatprep.subr.bf16.mxu0 0
        %503 = vmatpush1.bf16.msra.mxu0 0
        %504 = vmatprep.subr.bf16.mxu0 0
        %505 = vmatpush1.bf16.msra.mxu0 0
        %506 = vmatprep.subr.bf16.mxu0 0
        %507 = vmatpush1.bf16.msra.mxu0 0
        %508 = vmatprep.subr.bf16.mxu0 0
        %509 = vmatpush1.bf16.msra.mxu0 0
        %510 = vmatprep.subr.bf16.mxu0 0
        %511 = vmatpush1.bf16.msra.mxu0 0
        %512 = vmatprep.subr.bf16.mxu0 0
        %513 = vmatpush1.bf16.msra.mxu0 0
        %514 = vmatprep.subr.bf16.mxu0 0
        %515 = vmatpush1.bf16.msra.mxu0 0
        %516 = vmatprep.subr.bf16.mxu0 0
        %517 = vmatpush1.bf16.msra.mxu0 0
        %518 = vmatprep.subr.bf16.mxu0 0
        %519 = vmatpush1.bf16.msra.mxu0 0
        %520 = vmatprep.subr.bf16.mxu0 0
        %521 = vmatpush1.bf16.msra.mxu0 0
        %522 = vmatprep.subr.bf16.mxu0 0
        %523 = vmatpush1.bf16.msra.mxu0 0
        %524 = vmatprep.subr.bf16.mxu0 0
        %525 = vmatpush1.bf16.msra.mxu0 0
        %526 = vmatprep.mubr.bf16.mxu0 0
        %527 = vmatmul.mubr.bf16.gmra.mrb[0].mxu0 %v492
        %v528 = vpop.f32.mrb[0].mxu0
        %v529 = vadd.f32 0.0, %v528
        %v530 = vpop.f32.mrb[0].mxu0
        %v531 = vpop.f32.mrb[0].mxu0
        %v532 = vpop.f32.mrb[0].mxu0
        %533 = vdwg.mxu0
        %v542 = vunpack.c.l.b16 %v448
        %v543 = vunpack.c.l.b16 %v449
        %v544 = vunpack.c.l.b16 %v450
        %v545 = vunpack.c.l.b16 %v451
        %v546 = vunpack.c.l.b16 %v452
        %v547 = vunpack.c.l.b16 %v453
        %v548 = vunpack.c.l.b16 %v454
        %v549 = vunpack.c.l.b16 %v455
        %v550 = vpack.c.b16 %v543, %v542
        %v551 = vpack.c.b16 %v545, %v544
        %v552 = vpack.c.b16 %v547, %v546
        %v553 = vpack.c.b16 %v549, %v548
        %v559 = vsel %vm490, %v445, 0
        %561 = vmatprep.subr.bf16.mxu0 0
        %562 = vmatpush1.bf16.msra.mxu0 %v550
        %563 = vmatprep.subr.bf16.mxu0 0
        %564 = vmatpush1.bf16.msra.mxu0 %v551
        %565 = vmatprep.subr.bf16.mxu0 0
        %566 = vmatpush1.bf16.msra.mxu0 %v552
        %567 = vmatprep.subr.bf16.mxu0 0
        %568 = vmatpush1.bf16.msra.mxu0 %v553
        %569 = vmatprep.subr.bf16.mxu0 0
        %570 = vmatpush1.bf16.msra.mxu0 0
        %571 = vmatprep.subr.bf16.mxu0 0
        %572 = vmatpush1.bf16.msra.mxu0 0
        %573 = vmatprep.subr.bf16.mxu0 0
        %574 = vmatpush1.bf16.msra.mxu0 0
        %575 = vmatprep.subr.bf16.mxu0 0
        %576 = vmatpush1.bf16.msra.mxu0 0
        %577 = vmatprep.subr.bf16.mxu0 0
        %578 = vmatpush1.bf16.msra.mxu0 0
        %579 = vmatprep.subr.bf16.mxu0 0
        %580 = vmatpush1.bf16.msra.mxu0 0
        %581 = vmatprep.subr.bf16.mxu0 0
        %582 = vmatpush1.bf16.msra.mxu0 0
        %583 = vmatprep.subr.bf16.mxu0 0
        %584 = vmatpush1.bf16.msra.mxu0 0
        %585 = vmatprep.subr.bf16.mxu0 0
        %586 = vmatpush1.bf16.msra.mxu0 0
        %587 = vmatprep.subr.bf16.mxu0 0
        %588 = vmatpush1.bf16.msra.mxu0 0
        %589 = vmatprep.subr.bf16.mxu0 0
        %590 = vmatpush1.bf16.msra.mxu0 0
        %591 = vmatprep.subr.bf16.mxu0 0
        %592 = vmatpush1.bf16.msra.mxu0 0
        %593 = vmatprep.mubr.bf16.mxu0 0
        %594 = vmatmul.mubr.bf16.gmra.mrb[0].mxu0 %v559
        %v595 = vpop.f32.mrb[0].mxu0
        %v596 = vadd.f32 %v529, %v595
        %v597 = vpop.f32.mrb[0].mxu0
        %v598 = vpop.f32.mrb[0].mxu0
        %v599 = vpop.f32.mrb[0].mxu0
        %600 = vdwg.mxu0
        %v601 = vpack.c.bf16 %v437, %v437
        %s602 = scalar_lea.vmem %s2, 64
        %v603 = vld [vmem:[%s602] sm:$0xf]
        %v604 = vld [vmem:[%s602 + $0x4] sm:$0xf]
        %v605 = vld [vmem:[%s602 + $0x8] sm:$0xf]
        %v606 = vld [vmem:[%s602 + $0xc] sm:$0xf]
        %v607 = vld [vmem:[%s602 + $0x10] sm:$0xf]
        %v608 = vld [vmem:[%s602 + $0x14] sm:$0xf]
        %v609 = vld [vmem:[%s602 + $0x18] sm:$0xf]
        %v610 = vld [vmem:[%s602 + $0x1c] sm:$0xf]
        %v619 = vunpack.c.l.b16 %v603
        %v620 = vunpack.c.l.b16 %v604
        %v621 = vunpack.c.l.b16 %v605
        %v622 = vunpack.c.l.b16 %v606
        %v623 = vunpack.c.l.b16 %v607
        %v624 = vunpack.c.l.b16 %v608
        %v625 = vunpack.c.l.b16 %v609
        %v626 = vunpack.c.l.b16 %v610
        %v627 = vpack.c.b16 %v620, %v619
        %v628 = vpack.c.b16 %v622, %v621
        %v629 = vpack.c.b16 %v624, %v623
        %v630 = vpack.c.b16 %v626, %v625
        %v636 = vsel %vm490, %v601, 0
        %638 = vmatprep.subr.bf16.mxu0 0
        %639 = vmatpush1.bf16.msra.mxu0 %v627
        %640 = vmatprep.subr.bf16.mxu0 0
        %641 = vmatpush1.bf16.msra.mxu0 %v628
        %642 = vmatprep.subr.bf16.mxu0 0
        %643 = vmatpush1.bf16.msra.mxu0 %v629
        %644 = vmatprep.subr.bf16.mxu0 0
        %645 = vmatpush1.bf16.msra.mxu0 %v630
        %646 = vmatprep.subr.bf16.mxu0 0
        %647 = vmatpush1.bf16.msra.mxu0 0
        %648 = vmatprep.subr.bf16.mxu0 0
        %649 = vmatpush1.bf16.msra.mxu0 0
        %650 = vmatprep.subr.bf16.mxu0 0
        %651 = vmatpush1.bf16.msra.mxu0 0
        %652 = vmatprep.subr.bf16.mxu0 0
        %653 = vmatpush1.bf16.msra.mxu0 0
        %654 = vmatprep.subr.bf16.mxu0 0
        %655 = vmatpush1.bf16.msra.mxu0 0
        %656 = vmatprep.subr.bf16.mxu0 0
        %657 = vmatpush1.bf16.msra.mxu0 0
        %658 = vmatprep.subr.bf16.mxu0 0
        %659 = vmatpush1.bf16.msra.mxu0 0
        %660 = vmatprep.subr.bf16.mxu0 0
        %661 = vmatpush1.bf16.msra.mxu0 0
        %662 = vmatprep.subr.bf16.mxu0 0
        %663 = vmatpush1.bf16.msra.mxu0 0
        %664 = vmatprep.subr.bf16.mxu0 0
        %665 = vmatpush1.bf16.msra.mxu0 0
        %666 = vmatprep.subr.bf16.mxu0 0
        %667 = vmatpush1.bf16.msra.mxu0 0
        %668 = vmatprep.subr.bf16.mxu0 0
        %669 = vmatpush1.bf16.msra.mxu0 0
        %670 = vmatprep.mubr.bf16.mxu0 0
        %671 = vmatmul.mubr.bf16.gmra.mrb[0].mxu0 %v636
        %v672 = vpop.f32.mrb[0].mxu0
        %v673 = vadd.f32 0.0, %v672
        %v674 = vpop.f32.mrb[0].mxu0
        %v675 = vpop.f32.mrb[0].mxu0
        %v676 = vpop.f32.mrb[0].mxu0
        %677 = vdwg.mxu0
        %v678 = vadd.f32 %v596, %v673
        %s679 = scalar_lea.vmem %s2, 96
        %v680 = vld [vmem:[%s679] sm:$0xf]
        %v681 = vld [vmem:[%s679 + $0x4] sm:$0xf]
        %v682 = vld [vmem:[%s679 + $0x8] sm:$0xf]
        %v683 = vld [vmem:[%s679 + $0xc] sm:$0xf]
        %v684 = vld [vmem:[%s679 + $0x10] sm:$0xf]
        %v685 = vld [vmem:[%s679 + $0x14] sm:$0xf]
        %v686 = vld [vmem:[%s679 + $0x18] sm:$0xf]
        %v687 = vld [vmem:[%s679 + $0x1c] sm:$0xf]
        %v696 = vunpack.c.l.b16 %v680
        %v697 = vunpack.c.l.b16 %v681
        %v698 = vunpack.c.l.b16 %v682
        %v699 = vunpack.c.l.b16 %v683
        %v700 = vunpack.c.l.b16 %v684
        %v701 = vunpack.c.l.b16 %v685
        %v702 = vunpack.c.l.b16 %v686
        %v703 = vunpack.c.l.b16 %v687
        %v704 = vpack.c.b16 %v697, %v696
        %v705 = vpack.c.b16 %v699, %v698
        %v706 = vpack.c.b16 %v701, %v700
        %v707 = vpack.c.b16 %v703, %v702
        %v713 = vsel %vm490, %v447, 0
        %715 = vmatprep.subr.bf16.mxu0 0
        %716 = vmatpush1.bf16.msra.mxu0 %v704
        %717 = vmatprep.subr.bf16.mxu0 0
        %718 = vmatpush1.bf16.msra.mxu0 %v705
        %719 = vmatprep.subr.bf16.mxu0 0
        %720 = vmatpush1.bf16.msra.mxu0 %v706
        %721 = vmatprep.subr.bf16.mxu0 0
        %722 = vmatpush1.bf16.msra.mxu0 %v707
        %723 = vmatprep.subr.bf16.mxu0 0
        %724 = vmatpush1.bf16.msra.mxu0 0
        %725 = vmatprep.subr.bf16.mxu0 0
        %726 = vmatpush1.bf16.msra.mxu0 0
        %727 = vmatprep.subr.bf16.mxu0 0
        %728 = vmatpush1.bf16.msra.mxu0 0
        %729 = vmatprep.subr.bf16.mxu0 0
        %730 = vmatpush1.bf16.msra.mxu0 0
        %731 = vmatprep.subr.bf16.mxu0 0
        %732 = vmatpush1.bf16.msra.mxu0 0
        %733 = vmatprep.subr.bf16.mxu0 0
        %734 = vmatpush1.bf16.msra.mxu0 0
        %735 = vmatprep.subr.bf16.mxu0 0
        %736 = vmatpush1.bf16.msra.mxu0 0
        %737 = vmatprep.subr.bf16.mxu0 0
        %738 = vmatpush1.bf16.msra.mxu0 0
        %739 = vmatprep.subr.bf16.mxu0 0
        %740 = vmatpush1.bf16.msra.mxu0 0
        %741 = vmatprep.subr.bf16.mxu0 0
        %742 = vmatpush1.bf16.msra.mxu0 0
        %743 = vmatprep.subr.bf16.mxu0 0
        %744 = vmatpush1.bf16.msra.mxu0 0
        %745 = vmatprep.subr.bf16.mxu0 0
        %746 = vmatpush1.bf16.msra.mxu0 0
        %747 = vmatprep.mubr.bf16.mxu0 0
        %748 = vmatmul.mubr.bf16.gmra.mrb[0].mxu0 %v713
        %v749 = vpop.f32.mrb[0].mxu0
        %v750 = vadd.f32 0.0, %v749
        %v751 = vpop.f32.mrb[0].mxu0
        %v752 = vpop.f32.mrb[0].mxu0
        %v753 = vpop.f32.mrb[0].mxu0
        %754 = vdwg.mxu0
        %v755 = vadd.f32 %v678, %v750
        %v756 = vld [vmem:[%s5] sm:$0x1]
        %v758 = vlaneseq
        %v759 = vshrl.u32 %v758, 7
        %v760 = vsub.s32 0, %v759
        %v761 = vrot.slane %v756, %v760
        %v763 = vadd.f32 %v755, %v761
        %vm764 = vcmp.ge.f32.partialorder %v763, 0.0
        %v765 = vmul.f32 %v763, 0.2
        %v766 = vsel %vm764, %v763, %v765
        %v767 = vpack.c.bf16 %v766, %v766
        %v768 = vld [vmem:[%s3] sm:$0xf]
        %v769 = vld [vmem:[%s3 + $0x4] sm:$0xf]
        %v770 = vld [vmem:[%s3 + $0x8] sm:$0xf]
        %v771 = vld [vmem:[%s3 + $0xc] sm:$0xf]
        %v772 = vld [vmem:[%s3 + $0x10] sm:$0xf]
        %v773 = vld [vmem:[%s3 + $0x14] sm:$0xf]
        %v774 = vld [vmem:[%s3 + $0x18] sm:$0xf]
        %v775 = vld [vmem:[%s3 + $0x1c] sm:$0xf]
        %v776 = vld [vmem:[%s6] sm:$0x1]
        %v778 = vlaneseq
        %v779 = vshrl.u32 %v778, 7
        %v780 = vsub.s32 0, %v779
        %v781 = vrot.slane %v776, %v780
        %v791 = vunpack.c.l.b16 %v768
        %v792 = vunpack.c.l.b16 %v769
        %v793 = vunpack.c.l.b16 %v770
        %v794 = vunpack.c.l.b16 %v771
        %v795 = vunpack.c.l.b16 %v772
        %v796 = vunpack.c.l.b16 %v773
        %v797 = vunpack.c.l.b16 %v774
        %v798 = vunpack.c.l.b16 %v775
        %v799 = vpack.c.b16 %v792, %v791
        %v800 = vpack.c.b16 %v794, %v793
        %v801 = vpack.c.b16 %v796, %v795
        %v802 = vpack.c.b16 %v798, %v797
        %v808 = vsel %vm490, %v767, 0
        %810 = vmatprep.subr.bf16.mxu0 0
        %811 = vmatpush1.bf16.msra.mxu0 %v799
        %812 = vmatprep.subr.bf16.mxu0 0
        %813 = vmatpush1.bf16.msra.mxu0 %v800
        %814 = vmatprep.subr.bf16.mxu0 0
        %815 = vmatpush1.bf16.msra.mxu0 %v801
        %816 = vmatprep.subr.bf16.mxu0 0
        %817 = vmatpush1.bf16.msra.mxu0 %v802
        %818 = vmatprep.subr.bf16.mxu0 0
        %819 = vmatpush1.bf16.msra.mxu0 0
        %820 = vmatprep.subr.bf16.mxu0 0
        %821 = vmatpush1.bf16.msra.mxu0 0
        %822 = vmatprep.subr.bf16.mxu0 0
        %823 = vmatpush1.bf16.msra.mxu0 0
        %824 = vmatprep.subr.bf16.mxu0 0
        %825 = vmatpush1.bf16.msra.mxu0 0
        %826 = vmatprep.subr.bf16.mxu0 0
        %827 = vmatpush1.bf16.msra.mxu0 0
        %828 = vmatprep.subr.bf16.mxu0 0
        %829 = vmatpush1.bf16.msra.mxu0 0
        %830 = vmatprep.subr.bf16.mxu0 0
        %831 = vmatpush1.bf16.msra.mxu0 0
        %832 = vmatprep.subr.bf16.mxu0 0
        %833 = vmatpush1.bf16.msra.mxu0 0
        %834 = vmatprep.subr.bf16.mxu0 0
        %835 = vmatpush1.bf16.msra.mxu0 0
        %836 = vmatprep.subr.bf16.mxu0 0
        %837 = vmatpush1.bf16.msra.mxu0 0
        %838 = vmatprep.subr.bf16.mxu0 0
        %839 = vmatpush1.bf16.msra.mxu0 0
        %840 = vmatprep.subr.bf16.mxu0 0
        %841 = vmatpush1.bf16.msra.mxu0 0
        %842 = vmatprep.mubr.bf16.mxu0 0
        %843 = vmatmul.mubr.bf16.gmra.mrb[0].mxu0 %v808
        %v844 = vpop.f32.mrb[0].mxu0
        %v845 = vadd.f32 %v781, %v844
        %v846 = vpop.f32.mrb[0].mxu0
        %v847 = vpop.f32.mrb[0].mxu0
        %v848 = vpop.f32.mrb[0].mxu0
        %849 = vdwg.mxu0
        %850 = vst [vmem:[%s271] sm:$0xf] %v845
        %s851 = sand.u32 %s181, 1
        %s852 = scalar_lea.sflag [#allocation5], %s851
        %s853 = sand.u32 %s181, 1
        %s854 = smul.addr %s853, 4
        %s855 = scalar_lea.vmem [#allocation4], %s854
        // Predicated region
        $region49: #{_lambda_.1} parent=47 // pred_check
          %p856 = pneg %p191
        $region50: #{_lambda_.1} parent=47 // pred_check_branch
          %858 = sbr.rel (%p856) target = $region52
        $region51: #{_lambda_.1} parent=47 // pred_region
          %s860 = ssub.s32 64, 64
          %861 = vsyncadd %s852, %s860
          %s862 = smul.addr %s21, 64
          %s863 = scalar_lea.hbm %s7, %s862
          %s865 = sshll.u32 %s855, 4
          %s866 = int_to_ptr.vmem [resolvable:$true] %s865
          %868 = dma.vmem_to_hbm [thread:$0]  %s866, 64, %s863, %s852
        $region52: #{_lambda_.1} parent=47 // pred_fallthru
          _
      $region48: #{_lambda_.1} parent=5 // pred_fallthru
        _
      %p869 = scmp.le.s32.totalorder 2, %s16
      // Predicated region
      $region53: #{_lambda_.1} parent=5 // pred_check
        %p870 = pneg %p869
      $region54: #{_lambda_.1} parent=5 // pred_check_branch
        %872 = sbr.rel (%p870) target = $region56
      $region55: #{_lambda_.1} parent=5 // pred_region
        %s873 = ssub.s32 %s16, 2
        // Predicated region
        $region57: #{_lambda_.1} parent=55 // pred_check
          %p874 = pneg %p197
        $region58: #{_lambda_.1} parent=55 // pred_check_branch
          %876 = sbr.rel (%p874) target = $region60
        $region59: #{_lambda_.1} parent=55 // pred_region
          %s877 = sand.u32 %s182, 1
          %s878 = scalar_lea.sflag [#allocation5], %s877
          %s879 = sand.u32 %s182, 1
          %s880 = smul.addr %s879, 4
          %s881 = scalar_lea.vmem [#allocation4], %s880
          %882 = dma.done %s878, 64
        $region60: #{_lambda_.1} parent=55 // pred_fallthru
          _
      $region56: #{_lambda_.1} parent=5 // pred_fallthru
        _
    $region6: #{_lambda_.1} parent=1 // loop_footer
      %s20 = sadd.s32 1, %s16
    $region7: #{_lambda_.1} parent=1 // loop_footer_branch
      %15 = sbr.rel target = $region3
    $region8: #{_lambda_.1} parent=1 // loop_exit
      _
    %883 = vsyncpa [#allocation5], 1
    %s884 = scalar_lea.sflag [#allocation5], 1
    %885 = vsyncpa %s884, 1

</llo_original>
